<compile_context>
chip_gen: v7x
topology: tpu7x:2x2x1
jax: 0.10.0
libtpu: 0.0.40
codegen_flags: <defaults>
</compile_context>

<pallas_src>
import functools
import math

import jax
import jax.numpy as jnp
from jax import lax
from jax.experimental import pallas as pl
from jax.experimental.pallas import tpu as pltpu


def _mix32(u):
    """lowbias32-style 32-bit integer finalizer (bijective, strong diffusion)."""
    u = u ^ (u >> jnp.uint32(16))
    u = u * jnp.uint32(0x7FEB352D)
    u = u ^ (u >> jnp.uint32(15))
    u = u * jnp.uint32(0x846CA68B)
    u = u ^ (u >> jnp.uint32(16))
    return u


def _noise_kernel(seed_ref, x_ref, o_ref, *, sigma, block_rows, lane):
    half = lane // 2

    # ---- stateless counter-based RNG (portable uint32 ops, no pltpu.prng_*) ----
    seed_u = seed_ref[0].astype(jnp.uint32)
    key = _mix32(seed_u * jnp.uint32(0x9E3779B9) + jnp.uint32(0x85EBCA6B))

    row = lax.broadcasted_iota(jnp.uint32, (block_rows, half), 0)
    col = lax.broadcasted_iota(jnp.uint32, (block_rows, half), 1)
    base = pl.program_id(0).astype(jnp.uint32) * jnp.uint32(block_rows * half)
    ctr = base + row * jnp.uint32(half) + col  # unique counter per half-tile element

    bits1 = _mix32(_mix32(ctr * jnp.uint32(2) + key))
    bits2 = _mix32(_mix32(ctr * jnp.uint32(2) + jnp.uint32(1) + key))

    # 23 random bits -> u1 in (0, 1] (safe for log), u2 in [0, 1).
    inv23 = jnp.float32(1.0 / 8388608.0)  # 2^-23
    u1 = ((bits1 >> jnp.uint32(9)).astype(jnp.float32) + 1.0) * inv23
    u2 = (bits2 >> jnp.uint32(9)).astype(jnp.float32) * inv23

    # ---- paired Box-Muller: both outputs used -> half the EUP work/element ----
    r = jnp.float32(sigma) * jnp.sqrt(-2.0 * jnp.log(u1))  # sigma folded into radius
    theta = jnp.float32(2.0 * math.pi) * u2
    z = jnp.concatenate([r * jnp.cos(theta), r * jnp.sin(theta)], axis=-1)

    o_ref[...] = (x_ref[...].astype(jnp.float32) + z).astype(o_ref.dtype)


def noise_forward(x, seed, *, use_noise=True, sigma=0.2,
                  lane_width=512, max_block_rows=1024):
    """Pallas equivalent of Noise.forward: x + sigma * N(0, 1) if use_noise."""
    if not use_noise:
        return x

    assert lane_width % 256 == 0, "lane_width must be a multiple of 256"
    orig_shape = x.shape
    orig_dtype = x.dtype
    n = x.size
    lane = lane_width

    # Lane-dense 2-D slab: (rows_padded, lane) with a tail pad if needed.
    rows = max(1, -(-n // lane))
    if rows <= max_block_rows:
        block_rows = rows                 # block equals full array dim -> always legal
        rows_padded = rows
    else:
        block_rows = max_block_rows       # multiple of 8
        rows_padded = -(-rows // block_rows) * block_rows
    n_padded = rows_padded * lane
    grid = (rows_padded // block_rows,)

    x_flat = x.reshape(-1)
    if n_padded != n:
        x_flat = jnp.pad(x_flat, (0, n_padded - n))
    x2d = x_flat.reshape(rows_padded, lane)

    seed_arr = jnp.asarray([seed], dtype=jnp.int32)

    out2d = pl.pallas_call(
        functools.partial(_noise_kernel, sigma=float(sigma),
                          block_rows=block_rows, lane=lane),
        out_shape=jax.ShapeDtypeStruct((rows_padded, lane), orig_dtype),
        grid_spec=pltpu.PrefetchScalarGridSpec(
            num_scalar_prefetch=1,
            grid=grid,
            in_specs=[pl.BlockSpec((block_rows, lane), lambda i, seed: (i, 0))],
            out_specs=pl.BlockSpec((block_rows, lane), lambda i, seed: (i, 0)),
        ),
        compiler_params=pltpu.CompilerParams(
            # Blocks are fully independent (stateless counter RNG) -> can shard
            # across both TensorCores on v7x; neutral on v5e/v6e.
            dimension_semantics=("parallel",),
        ),
    )(seed_arr, x2d)

    return out2d.reshape(-1)[:n].reshape(orig_shape)


if __name__ == "__main__":
    key = jax.random.PRNGKey(0)
    x = jax.random.normal(key, (2, 4, 16, 16), dtype=jnp.float32)

    # use_noise=True path (the interesting one)
    y = noise_forward(x, seed=0, use_noise=True, sigma=0.2)
    y = jax.block_until_ready(y)
    assert y.shape == x.shape and y.dtype == x.dtype
    assert bool(jnp.all(jnp.isfinite(y)))

    # sanity: residual noise should have std ~ sigma
    resid_std = float(jnp.std(y - x))
    assert 0.1 < resid_std < 0.3, f"unexpected noise std {resid_std}"

    # dtype preservation (PyTorch semantics): bf16 in -> bf16 out
    xb = x.astype(jnp.bfloat16)
    yb = jax.block_until_ready(noise_forward(xb, seed=3, use_noise=True, sigma=0.2))
    assert yb.dtype == jnp.bfloat16 and yb.shape == xb.shape
    assert bool(jnp.all(jnp.isfinite(yb.astype(jnp.float32))))

    # use_noise=False path is identity
    y_id = jax.block_until_ready(noise_forward(x, seed=0, use_noise=False))
    assert bool(jnp.all(y_id == x))

    print("KERNEL_OK")
</pallas_src>

<mosaic_0001>
module attributes {stable_mosaic.version = 11 : i64} {
  func.func @_noise_kernel(%arg0: i32, %arg1: memref<1xi32, #tpu.memory_space<smem>>, %arg2: memref<4x512xf32, #tpu.memory_space<vmem>>, %arg3: memref<4x512xf32, #tpu.memory_space<vmem>>) attributes {dimension_semantics = [#tpu.dimension_semantics<parallel>], iteration_bounds = array<i64: 1>, scalar_prefetch = 1 : i64, scratch_operands = 0 : i64, tpu.core_type = #tpu.core_type<tc>, window_params = [{transform_indices = @transform_0, window_bounds = array<i64: 4, 512>}, {transform_indices = @transform_1, window_bounds = array<i64: 4, 512>}]} {
    %c0 = arith.constant 0 : index
    %0 = memref.load %arg1[%c0] : memref<1xi32, #tpu.memory_space<smem>>
    %c-1640531527_i32 = arith.constant -1640531527 : i32
    %1 = arith.muli %0, %c-1640531527_i32 : i32
    %c-2048144789_i32 = arith.constant -2048144789 : i32
    %2 = arith.addi %1, %c-2048144789_i32 : i32
    %c16_i32 = arith.constant 16 : i32
    %3 = arith.shrui %2, %c16_i32 : i32
    %4 = arith.xori %2, %3 : i32
    %c2146121005_i32 = arith.constant 2146121005 : i32
    %5 = arith.muli %4, %c2146121005_i32 : i32
    %c15_i32 = arith.constant 15 : i32
    %6 = arith.shrui %5, %c15_i32 : i32
    %7 = arith.xori %5, %6 : i32
    %c-2073254261_i32 = arith.constant -2073254261 : i32
    %8 = arith.muli %7, %c-2073254261_i32 : i32
    %c16_i32_0 = arith.constant 16 : i32
    %9 = arith.shrui %8, %c16_i32_0 : i32
    %10 = arith.xori %8, %9 : i32
    %11 = tpu.iota {dimensions = array<i32: 0>} : vector<4x256xi32>
    %12 = tpu.iota {dimensions = array<i32: 1>} : vector<4x256xi32>
    %c1024_i32 = arith.constant 1024 : i32
    %13 = arith.muli %arg0, %c1024_i32 : i32
    %c256_i32 = arith.constant 256 : i32
    %14 = vector.broadcast %c256_i32 : i32 to vector<4x256xi32>
    %15 = arith.muli %11, %14 : vector<4x256xi32>
    %16 = vector.broadcast %13 : i32 to vector<4x256xi32>
    %17 = arith.addi %16, %15 : vector<4x256xi32>
    %18 = arith.addi %17, %12 : vector<4x256xi32>
    %c2_i32 = arith.constant 2 : i32
    %19 = vector.broadcast %c2_i32 : i32 to vector<4x256xi32>
    %20 = arith.muli %18, %19 : vector<4x256xi32>
    %21 = vector.broadcast %10 : i32 to vector<4x256xi32>
    %22 = arith.addi %20, %21 : vector<4x256xi32>
    %c16_i32_1 = arith.constant 16 : i32
    %23 = vector.broadcast %c16_i32_1 : i32 to vector<4x256xi32>
    %24 = arith.shrui %22, %23 : vector<4x256xi32>
    %25 = arith.xori %22, %24 : vector<4x256xi32>
    %c2146121005_i32_2 = arith.constant 2146121005 : i32
    %26 = vector.broadcast %c2146121005_i32_2 : i32 to vector<4x256xi32>
    %27 = arith.muli %25, %26 : vector<4x256xi32>
    %c15_i32_3 = arith.constant 15 : i32
    %28 = vector.broadcast %c15_i32_3 : i32 to vector<4x256xi32>
    %29 = arith.shrui %27, %28 : vector<4x256xi32>
    %30 = arith.xori %27, %29 : vector<4x256xi32>
    %c-2073254261_i32_4 = arith.constant -2073254261 : i32
    %31 = vector.broadcast %c-2073254261_i32_4 : i32 to vector<4x256xi32>
    %32 = arith.muli %30, %31 : vector<4x256xi32>
    %c16_i32_5 = arith.constant 16 : i32
    %33 = vector.broadcast %c16_i32_5 : i32 to vector<4x256xi32>
    %34 = arith.shrui %32, %33 : vector<4x256xi32>
    %35 = arith.xori %32, %34 : vector<4x256xi32>
    %c16_i32_6 = arith.constant 16 : i32
    %36 = vector.broadcast %c16_i32_6 : i32 to vector<4x256xi32>
    %37 = arith.shrui %35, %36 : vector<4x256xi32>
    %38 = arith.xori %35, %37 : vector<4x256xi32>
    %c2146121005_i32_7 = arith.constant 2146121005 : i32
    %39 = vector.broadcast %c2146121005_i32_7 : i32 to vector<4x256xi32>
    %40 = arith.muli %38, %39 : vector<4x256xi32>
    %c15_i32_8 = arith.constant 15 : i32
    %41 = vector.broadcast %c15_i32_8 : i32 to vector<4x256xi32>
    %42 = arith.shrui %40, %41 : vector<4x256xi32>
    %43 = arith.xori %40, %42 : vector<4x256xi32>
    %c-2073254261_i32_9 = arith.constant -2073254261 : i32
    %44 = vector.broadcast %c-2073254261_i32_9 : i32 to vector<4x256xi32>
    %45 = arith.muli %43, %44 : vector<4x256xi32>
    %c16_i32_10 = arith.constant 16 : i32
    %46 = vector.broadcast %c16_i32_10 : i32 to vector<4x256xi32>
    %47 = arith.shrui %45, %46 : vector<4x256xi32>
    %48 = arith.xori %45, %47 : vector<4x256xi32>
    %c2_i32_11 = arith.constant 2 : i32
    %49 = vector.broadcast %c2_i32_11 : i32 to vector<4x256xi32>
    %50 = arith.muli %18, %49 : vector<4x256xi32>
    %c1_i32 = arith.constant 1 : i32
    %51 = vector.broadcast %c1_i32 : i32 to vector<4x256xi32>
    %52 = arith.addi %50, %51 : vector<4x256xi32>
    %53 = vector.broadcast %10 : i32 to vector<4x256xi32>
    %54 = arith.addi %52, %53 : vector<4x256xi32>
    %c16_i32_12 = arith.constant 16 : i32
    %55 = vector.broadcast %c16_i32_12 : i32 to vector<4x256xi32>
    %56 = arith.shrui %54, %55 : vector<4x256xi32>
    %57 = arith.xori %54, %56 : vector<4x256xi32>
    %c2146121005_i32_13 = arith.constant 2146121005 : i32
    %58 = vector.broadcast %c2146121005_i32_13 : i32 to vector<4x256xi32>
    %59 = arith.muli %57, %58 : vector<4x256xi32>
    %c15_i32_14 = arith.constant 15 : i32
    %60 = vector.broadcast %c15_i32_14 : i32 to vector<4x256xi32>
    %61 = arith.shrui %59, %60 : vector<4x256xi32>
    %62 = arith.xori %59, %61 : vector<4x256xi32>
    %c-2073254261_i32_15 = arith.constant -2073254261 : i32
    %63 = vector.broadcast %c-2073254261_i32_15 : i32 to vector<4x256xi32>
    %64 = arith.muli %62, %63 : vector<4x256xi32>
    %c16_i32_16 = arith.constant 16 : i32
    %65 = vector.broadcast %c16_i32_16 : i32 to vector<4x256xi32>
    %66 = arith.shrui %64, %65 : vector<4x256xi32>
    %67 = arith.xori %64, %66 : vector<4x256xi32>
    %c16_i32_17 = arith.constant 16 : i32
    %68 = vector.broadcast %c16_i32_17 : i32 to vector<4x256xi32>
    %69 = arith.shrui %67, %68 : vector<4x256xi32>
    %70 = arith.xori %67, %69 : vector<4x256xi32>
    %c2146121005_i32_18 = arith.constant 2146121005 : i32
    %71 = vector.broadcast %c2146121005_i32_18 : i32 to vector<4x256xi32>
    %72 = arith.muli %70, %71 : vector<4x256xi32>
    %c15_i32_19 = arith.constant 15 : i32
    %73 = vector.broadcast %c15_i32_19 : i32 to vector<4x256xi32>
    %74 = arith.shrui %72, %73 : vector<4x256xi32>
    %75 = arith.xori %72, %74 : vector<4x256xi32>
    %c-2073254261_i32_20 = arith.constant -2073254261 : i32
    %76 = vector.broadcast %c-2073254261_i32_20 : i32 to vector<4x256xi32>
    %77 = arith.muli %75, %76 : vector<4x256xi32>
    %c16_i32_21 = arith.constant 16 : i32
    %78 = vector.broadcast %c16_i32_21 : i32 to vector<4x256xi32>
    %79 = arith.shrui %77, %78 : vector<4x256xi32>
    %80 = arith.xori %77, %79 : vector<4x256xi32>
    %c9_i32 = arith.constant 9 : i32
    %81 = vector.broadcast %c9_i32 : i32 to vector<4x256xi32>
    %82 = arith.shrui %48, %81 : vector<4x256xi32>
    %83 = arith.uitofp %82 : vector<4x256xi32> to vector<4x256xf32>
    %cst = arith.constant 1.000000e+00 : f32
    %84 = vector.broadcast %cst : f32 to vector<4x256xf32>
    %85 = arith.addf %83, %84 : vector<4x256xf32>
    %cst_22 = arith.constant 1.1920929E-7 : f32
    %86 = vector.broadcast %cst_22 : f32 to vector<4x256xf32>
    %87 = arith.mulf %85, %86 : vector<4x256xf32>
    %c9_i32_23 = arith.constant 9 : i32
    %88 = vector.broadcast %c9_i32_23 : i32 to vector<4x256xi32>
    %89 = arith.shrui %80, %88 : vector<4x256xi32>
    %90 = arith.uitofp %89 : vector<4x256xi32> to vector<4x256xf32>
    %cst_24 = arith.constant 1.1920929E-7 : f32
    %91 = vector.broadcast %cst_24 : f32 to vector<4x256xf32>
    %92 = arith.mulf %90, %91 : vector<4x256xf32>
    %93 = math.log %87 : vector<4x256xf32>
    %cst_25 = arith.constant -2.000000e+00 : f32
    %94 = vector.broadcast %cst_25 : f32 to vector<4x256xf32>
    %95 = arith.mulf %94, %93 : vector<4x256xf32>
    %96 = math.sqrt %95 : vector<4x256xf32>
    %cst_26 = arith.constant 2.000000e-01 : f32
    %97 = vector.broadcast %cst_26 : f32 to vector<4x256xf32>
    %98 = arith.mulf %97, %96 : vector<4x256xf32>
    %cst_27 = arith.constant 6.28318548 : f32
    %99 = vector.broadcast %cst_27 : f32 to vector<4x256xf32>
    %100 = arith.mulf %99, %92 : vector<4x256xf32>
    %101 = math.cos %100 : vector<4x256xf32>
    %102 = arith.mulf %98, %101 : vector<4x256xf32>
    %103 = math.sin %100 : vector<4x256xf32>
    %104 = arith.mulf %98, %103 : vector<4x256xf32>
    %105 = tpu.concatenate %102, %104 in 1 : vector<4x256xf32>, vector<4x256xf32> -> vector<4x512xf32>
    %c0_28 = arith.constant 0 : index
    %c0_29 = arith.constant 0 : index
    %106 = vector.load %arg2[%c0_28, %c0_29] : memref<4x512xf32, #tpu.memory_space<vmem>>, vector<4x512xf32>
    %107 = arith.addf %106, %105 : vector<4x512xf32>
    %c0_30 = arith.constant 0 : index
    %c0_31 = arith.constant 0 : index
    %108 = vector.load %arg3[%c0_30, %c0_31] : memref<4x512xf32, #tpu.memory_space<vmem>>, vector<4x512xf32>
    tpu.vector_store %arg3[%c0_30, %c0_31], %107 {strides = array<i32>} : memref<4x512xf32, #tpu.memory_space<vmem>>, vector<4x512xf32>,
    return
  }
  func.func @transform_0(%arg0: i32, %arg1: memref<1xi32, #tpu.memory_space<smem>>) -> (i32, i32) {
    %c0_i32 = arith.constant 0 : i32
    %c0_i32_0 = arith.constant 0 : i32
    return %arg0, %c0_i32 : i32, i32
  }
  func.func @transform_1(%arg0: i32, %arg1: memref<1xi32, #tpu.memory_space<smem>>) -> (i32, i32) {
    %c0_i32 = arith.constant 0 : i32
    %c0_i32_0 = arith.constant 0 : i32
    return %arg0, %c0_i32 : i32, i32
  }
}

</mosaic_0001>

<llo_original>
// kernel: tpu_custom_call.1
$region0: #{tpu_custom_call.1}
  #allocation0 [shape = 'u32[]', space=smem, size = 0x4, offset = 0x4, fixed_abs, tag = 'smem constant byte address 0x4 - core index']
  #allocation1 [shape = 'u32[144,128]{1,0:T(1,128)}', space=vmem, size = 0x12000, scoped, tag = 'internal scratch']
  #allocation2 [shape = 's32[1]{0}', space=sflag, size = 0x4, scoped, tag = 'scoped memory for tpu_custom_call.1']
  #allocation3 [shape = 's32[1]{0:T(128)S(6)}', space=smem, size = 0x200, scoped, tag = 'prefetched SMEM operand 0']
  %s0 = inlined_call_operand.<no memory space> [shape: s32[1], index: 0, kind: input, shape index: {}]
  %s1 = inlined_call_operand.hbm [shape: f32[4,512], index: 1, kind: input, shape index: {}]
  %s2 = inlined_call_operand.hbm [shape: f32[4,512], index: 2, kind: output, shape index: {}]
  %s3 = sld [smem:[#allocation0]]
  $region18: #{tpu_custom_call.1} parent=0
    _
  %s5 = ssub.s32 1, %s3
  %s6 = scalar_select 0, %s5, %s3
  %7 = sst [smem:[#allocation3]] %s0
  $region1: #{tpu_custom_call.1} parent=0
    #allocation4 [shape = 'u8[8192]{0}', space=vmem, size = 0x2000, scoped, tag = 'input window, operand 1, single buffered']
    #allocation5 [shape = 's32[1]{0}', space=sflag, size = 0x4, scoped, tag = 'scoped memory for tpu_custom_call.1']
    #allocation6 [shape = 's32[1]{0}', space=sflag, size = 0x4, scoped, tag = 'scoped memory for tpu_custom_call.1']
    #allocation7 [shape = 'u8[8192]{0}', space=vmem, size = 0x2000, scoped, tag = 'output window, operand 0, single buffered']
    %8 = vsyncpa [#allocation5], 0
    %9 = vsyncpa [#allocation6], 0
    // Predicated region
    $region2: #{tpu_custom_call.1} parent=1 // pred_check
      _
    $region3: #{tpu_custom_call.1} parent=1 // pred_check_branch
      %11 = sbr.rel (0) target = $region5
    $region4: #{tpu_custom_call.1} parent=1 // pred_region
      %s13 = ssub.s32 256, 256
      %14 = vsyncadd [#allocation5], %s13
      %s16 = sshll.u32 [#allocation4], 4
      %s17 = int_to_ptr.vmem [resolvable:$true] %s16
      %19 = dma.hbm_to_vmem [thread:$0]  %s1, 256, %s17, [#allocation5]
    $region5: #{tpu_custom_call.1} parent=1 // pred_fallthru
      _
    // Predicated region
    $region6: #{tpu_custom_call.1} parent=1 // pred_check
      _
    $region7: #{tpu_custom_call.1} parent=1 // pred_check_branch
      %21 = sbr.rel (0) target = $region9
    $region8: #{tpu_custom_call.1} parent=1 // pred_region
      %22 = dma.done [#allocation5], 256
    $region9: #{tpu_custom_call.1} parent=1 // pred_fallthru
      _
    %s23 = sld [smem:[#allocation3]]
    %s24 = smul.u32 %s23, 2654435769
    %s25 = sadd.s32 %s24, 2246822507
    %s26 = sshrl.u32 %s25, 16
    %s27 = sxor.u32 %s25, %s26
    %s28 = smul.u32 %s27, 2146121005
    %s29 = sshrl.u32 %s28, 15
    %s30 = sxor.u32 %s28, %s29
    %s31 = smul.u32 %s30, 2221713035
    %s32 = sshrl.u32 %s31, 16
    %s33 = sxor.u32 %s31, %s32
    %v34 = vlaneseq
    %v35 = vshrl.u32 %v34, 7
    %v36 = vlaneseq
    %v37 = vand.u32 %v36, 127
    %v38 = vadd.s32 %v37, 128
    %s39 = smul.u32 0, 1024
    %v40 = vmul.u32 %v35, 256
    %v41 = vstv %s39
    %v42 = vadd.s32 %v41, %v40
    %v43 = vadd.s32 %v42, %v37
    %v44 = vadd.s32 %v42, %v38
    %v45 = vmul.u32 %v43, 2
    %v46 = vmul.u32 %v44, 2
    %v47 = vstv %s33
    %v48 = vadd.s32 %v45, %v47
    %v49 = vadd.s32 %v46, %v47
    %v50 = vshrl.u32 %v48, 16
    %v51 = vshrl.u32 %v49, 16
    %v52 = vxor.u32 %v48, %v50
    %v53 = vxor.u32 %v49, %v51
    %v54 = vmul.u32 %v52, 2146121005
    %v55 = vmul.u32 %v53, 2146121005
    %v56 = vshrl.u32 %v54, 15
    %v57 = vshrl.u32 %v55, 15
    %v58 = vxor.u32 %v54, %v56
    %v59 = vxor.u32 %v55, %v57
    %v60 = vmul.u32 %v58, 2221713035
    %v61 = vmul.u32 %v59, 2221713035
    %v62 = vshrl.u32 %v60, 16
    %v63 = vshrl.u32 %v61, 16
    %v64 = vxor.u32 %v60, %v62
    %v65 = vxor.u32 %v61, %v63
    %v66 = vshrl.u32 %v64, 16
    %v67 = vshrl.u32 %v65, 16
    %v68 = vxor.u32 %v64, %v66
    %v69 = vxor.u32 %v65, %v67
    %v70 = vmul.u32 %v68, 2146121005
    %v71 = vmul.u32 %v69, 2146121005
    %v72 = vshrl.u32 %v70, 15
    %v73 = vshrl.u32 %v71, 15
    %v74 = vxor.u32 %v70, %v72
    %v75 = vxor.u32 %v71, %v73
    %v76 = vmul.u32 %v74, 2221713035
    %v77 = vmul.u32 %v75, 2221713035
    %v78 = vshrl.u32 %v76, 16
    %v79 = vshrl.u32 %v77, 16
    %v80 = vxor.u32 %v76, %v78
    %v81 = vxor.u32 %v77, %v79
    %v82 = vadd.s32 %v45, 1
    %v83 = vadd.s32 %v46, 1
    %v84 = vadd.s32 %v82, %v47
    %v85 = vadd.s32 %v83, %v47
    %v86 = vshrl.u32 %v84, 16
    %v87 = vshrl.u32 %v85, 16
    %v88 = vxor.u32 %v84, %v86
    %v89 = vxor.u32 %v85, %v87
    %v90 = vmul.u32 %v88, 2146121005
    %v91 = vmul.u32 %v89, 2146121005
    %v92 = vshrl.u32 %v90, 15
    %v93 = vshrl.u32 %v91, 15
    %v94 = vxor.u32 %v90, %v92
    %v95 = vxor.u32 %v91, %v93
    %v96 = vmul.u32 %v94, 2221713035
    %v97 = vmul.u32 %v95, 2221713035
    %v98 = vshrl.u32 %v96, 16
    %v99 = vshrl.u32 %v97, 16
    %v100 = vxor.u32 %v96, %v98
    %v101 = vxor.u32 %v97, %v99
    %v102 = vshrl.u32 %v100, 16
    %v103 = vshrl.u32 %v101, 16
    %v104 = vxor.u32 %v100, %v102
    %v105 = vxor.u32 %v101, %v103
    %v106 = vmul.u32 %v104, 2146121005
    %v107 = vmul.u32 %v105, 2146121005
    %v108 = vshrl.u32 %v106, 15
    %v109 = vshrl.u32 %v107, 15
    %v110 = vxor.u32 %v106, %v108
    %v111 = vxor.u32 %v107, %v109
    %v112 = vmul.u32 %v110, 2221713035
    %v113 = vmul.u32 %v111, 2221713035
    %v114 = vshrl.u32 %v112, 16
    %v115 = vshrl.u32 %v113, 16
    %v116 = vxor.u32 %v112, %v114
    %v117 = vxor.u32 %v113, %v115
    %v118 = vshrl.u32 %v80, 9
    %v119 = vshrl.u32 %v81, 9
    %v120 = vshrl.u32 %v118, 16
    %v121 = vand.u32 %v118, 65535
    %v122 = vcvt.s32.f32 %v120
    %v123 = vmul.f32 %v122, 65536.0
    %v124 = vcvt.s32.f32 %v121
    %v125 = vadd.f32 %v123, %v124
    %v126 = vshrl.u32 %v119, 16
    %v127 = vand.u32 %v119, 65535
    %v128 = vcvt.s32.f32 %v126
    %v129 = vmul.f32 %v128, 65536.0
    %v130 = vcvt.s32.f32 %v127
    %v131 = vadd.f32 %v129, %v130
    %v132 = vadd.f32 %v125, 1.0
    %v133 = vadd.f32 %v131, 1.0
    %v134 = vmul.f32 %v132, 1.1920929e-07
    %v135 = vmul.f32 %v133, 1.1920929e-07
    %v136 = vshrl.u32 %v116, 9
    %v137 = vshrl.u32 %v117, 9
    %v138 = vshrl.u32 %v136, 16
    %v139 = vand.u32 %v136, 65535
    %v140 = vcvt.s32.f32 %v138
    %v141 = vmul.f32 %v140, 65536.0
    %v142 = vcvt.s32.f32 %v139
    %v143 = vadd.f32 %v141, %v142
    %v144 = vshrl.u32 %v137, 16
    %v145 = vand.u32 %v137, 65535
    %v146 = vcvt.s32.f32 %v144
    %v147 = vmul.f32 %v146, 65536.0
    %v148 = vcvt.s32.f32 %v145
    %v149 = vadd.f32 %v147, %v148
    %v150 = vmul.f32 %v143, 1.1920929e-07
    %v151 = vmul.f32 %v149, 1.1920929e-07
    %v152 = vlog2.pop %v134
    %v153 = vmul.f32 %v152, 0.6931472
    %v154 = vlog2.pop %v135
    %v155 = vmul.f32 %v154, 0.6931472
    %v156 = vmul.f32 %v153, -2.0
    %v157 = vmul.f32 %v155, -2.0
    %v158 = vrsqrt.pop %v156
    %v159 = vmul.f32 %v156, %v158
    %vm160 = vcmp.eq.f32.partialorder %v156, inf
    %v161 = vsel %vm160, %v156, %v159
    %vm162 = vcmp.eq.f32.partialorder %v156, 0.0
    %v163 = vand.u32 %v156, 2147483648
    %v164 = vsel %vm162, %v163, %v161
    %v165 = vrsqrt.pop %v157
    %v166 = vmul.f32 %v157, %v165
    %vm167 = vcmp.eq.f32.partialorder %v157, inf
    %v168 = vsel %vm167, %v157, %v166
    %vm169 = vcmp.eq.f32.partialorder %v157, 0.0
    %v170 = vand.u32 %v157, 2147483648
    %v171 = vsel %vm169, %v170, %v168
    %v172 = vmul.f32 %v164, 0.2
    %v173 = vmul.f32 %v171, 0.2
    %v174 = vmul.f32 %v150, 6.2831855
    %v175 = vmul.f32 %v151, 6.2831855
    %v176 = vand.u32 2147483647, %v174
    %vm177 = vcmp.le.f32.partialorder %v176, 0.7853982
    %vm178 = vcmp.lt.s32.totalorder %v174, 0
    %v179 = vand.u32 %v174, 2139095040
    %v180 = vshrl.u32 %v179, 23
    %v181 = vsub.s32 %v180, 127
    %v182 = vand.u32 2147483647, %v174
    %v183 = vand.u32 %v182, 8388607
    %v184 = vor.u32 %v183, 8388608
    %v185 = vsub.s32 0, %v184
    %v186 = vadd.s32 %v181, 1
    %vm187 = vcmp.gt.s32.totalorder %v186, 0
    %v188 = vsel %vm187, %v186, 0
    %v189 = vshrl.u32 %v188, 5
    %v190 = vand.u32 %v188, 31
    %v191 = vsub.s32 32, %v190
    %v192 = vshrl.u32 683565275, %v191
    %v193 = vshll.u32 683565275, %v190
    %v194 = vshrl.u32 2475754826, %v191
    %v195 = vor.u32 %v193, %v194
    %v196 = vshll.u32 2475754826, %v190
    %v197 = vshrl.u32 2131351028, %v191
    %v198 = vor.u32 %v196, %v197
    %v199 = vshll.u32 2131351028, %v190
    %v200 = vshrl.u32 2102212464, %v191
    %v201 = vor.u32 %v199, %v200
    %v202 = vshll.u32 2102212464, %v190
    %v203 = vshrl.u32 920167782, %v191
    %v204 = vor.u32 %v202, %v203
    %v205 = vshll.u32 920167782, %v190
    %v206 = vshrl.u32 1326507024, %v191
    %v207 = vor.u32 %v205, %v206
    %vm208 = vcmp.lt.s32.totalorder %v189, 1
    %vm209 = vcmp.lt.s32.totalorder %v189, 2
    %vm210 = vcmp.lt.s32.totalorder %v189, 3
    %vm211 = vcmp.lt.s32.totalorder %v189, 4
    %v212 = vsel %vm208, %v192, %v195
    %v213 = vsel %vm211, %v201, 2102212464
    %v214 = vsel %vm210, %v198, %v213
    %v215 = vsel %vm209, %v212, %v214
    %v216 = vsel %vm208, %v195, %v198
    %v217 = vsel %vm211, %v204, 920167782
    %v218 = vsel %vm210, %v201, %v217
    %v219 = vsel %vm209, %v216, %v218
    %v220 = vsel %vm208, %v198, %v201
    %v221 = vsel %vm211, %v207, 1326507024
    %v222 = vsel %vm210, %v204, %v221
    %v223 = vsel %vm209, %v220, %v222
    %v224 = vshll.u32 %v184, 8
    %v225 = vmul.u32.u64.compose %v224, %v223
    %v226 = vextract.low.u32 %v225
    %v227 = vextract.high.u32 %v225
    %v228 = vmul.u32.u64.compose %v224, %v219
    %v229 = vextract.low.u32 %v228
    %v230 = vextract.high.u32 %v228
    %v231 = vmul.u32 %v224, %v215
    %v232 = vadd.s32 %v227, %v229
    %vm233 = vc.u32 %v227, %v229
    %v234 = vadd.s32 %v230, 1
    %v235 = vsel %vm233, %v234, %v230
    %v236 = vadd.s32 %v231, %v235
    %v237 = vadd.s32 %v236, 536870912
    %v238 = vshrl.u32 %v237, 30
    %v239 = vshll.u32 %v238, 30
    %v240 = vsub.s32 %v236, %v239
    %vm241 = vcmp.lt.s32.totalorder %v240, 0
    %v242 = vsub.s32 0, %v240
    %v243 = vsel %vm241, %v242, %v240
    %v244 = vclz %v243
    %v245 = vsub.s32 %v244, 2
    %vm246 = vcmp.gt.s32.totalorder 0, %v245
    %v247 = vsel %vm246, 0, %v245
    %v248 = vsub.s32 32, %v247
    %v249 = vshll.u32 %v240, %v247
    %v250 = vshrl.u32 %v232, %v248
    %v251 = vor.u32 %v249, %v250
    %v252 = vsub.s32 4294967266, %v247
    %v253 = vadd.s32 %v252, 127
    %v254 = vshll.u32 %v253, 23
    %v255 = vor.u32 4788187, %v254
    %v256 = vand.u32 2147483647, %v255
    %v258 = vcvt.s32.f32 %v251
    %v259 = vmul.f32 %v258, %v256
    %v260 = vxor.u32 %v259, 2147483648
    %v261 = vsel %vm178, %v260, %v259
    %v262 = vsub.s32 4, %v238
    %v263 = vsel %vm178, %v262, %v238
    %v264 = vsel %vm177, %v174, %v261
    %v265 = vsel %vm177, 0, %v263
    %v266 = vcosq.f32.pop %v264
    %v267 = vsinq.f32.pop %v264
    %vm268 = vweird.f32 %v174
    %v269 = vand.u32 %v265, 3
    %vm270 = vcmp.lt.s32.totalorder %v269, 2
    %vm271 = vcmp.eq.s32.totalorder %v269, 0
    %v272 = vxor.u32 %v267, 2147483648
    %v273 = vsel %vm271, %v266, %v272
    %vm274 = vcmp.eq.s32.totalorder %v269, 2
    %v275 = vxor.u32 %v266, 2147483648
    %v276 = vsel %vm274, %v275, %v267
    %v277 = vsel %vm270, %v273, %v276
    %v278 = vsel %vm268, nan, %v277
    %v279 = vand.u32 2147483647, %v175
    %vm280 = vcmp.le.f32.partialorder %v279, 0.7853982
    %vm281 = vcmp.lt.s32.totalorder %v175, 0
    %v282 = vand.u32 %v175, 2139095040
    %v283 = vshrl.u32 %v282, 23
    %v284 = vsub.s32 %v283, 127
    %v285 = vand.u32 2147483647, %v175
    %v286 = vand.u32 %v285, 8388607
    %v287 = vor.u32 %v286, 8388608
    %v288 = vsub.s32 0, %v287
    %v289 = vadd.s32 %v284, 1
    %vm290 = vcmp.gt.s32.totalorder %v289, 0
    %v291 = vsel %vm290, %v289, 0
    %v292 = vshrl.u32 %v291, 5
    %v293 = vand.u32 %v291, 31
    %v294 = vsub.s32 32, %v293
    %v295 = vshrl.u32 683565275, %v294
    %v296 = vshll.u32 683565275, %v293
    %v297 = vshrl.u32 2475754826, %v294
    %v298 = vor.u32 %v296, %v297
    %v299 = vshll.u32 2475754826, %v293
    %v300 = vshrl.u32 2131351028, %v294
    %v301 = vor.u32 %v299, %v300
    %v302 = vshll.u32 2131351028, %v293
    %v303 = vshrl.u32 2102212464, %v294
    %v304 = vor.u32 %v302, %v303
    %v305 = vshll.u32 2102212464, %v293
    %v306 = vshrl.u32 920167782, %v294
    %v307 = vor.u32 %v305, %v306
    %v308 = vshll.u32 920167782, %v293
    %v309 = vshrl.u32 1326507024, %v294
    %v310 = vor.u32 %v308, %v309
    %vm311 = vcmp.lt.s32.totalorder %v292, 1
    %vm312 = vcmp.lt.s32.totalorder %v292, 2
    %vm313 = vcmp.lt.s32.totalorder %v292, 3
    %vm314 = vcmp.lt.s32.totalorder %v292, 4
    %v315 = vsel %vm311, %v295, %v298
    %v316 = vsel %vm314, %v304, 2102212464
    %v317 = vsel %vm313, %v301, %v316
    %v318 = vsel %vm312, %v315, %v317
    %v319 = vsel %vm311, %v298, %v301
    %v320 = vsel %vm314, %v307, 920167782
    %v321 = vsel %vm313, %v304, %v320
    %v322 = vsel %vm312, %v319, %v321
    %v323 = vsel %vm311, %v301, %v304
    %v324 = vsel %vm314, %v310, 1326507024
    %v325 = vsel %vm313, %v307, %v324
    %v326 = vsel %vm312, %v323, %v325
    %v327 = vshll.u32 %v287, 8
    %v328 = vmul.u32.u64.compose %v327, %v326
    %v329 = vextract.low.u32 %v328
    %v330 = vextract.high.u32 %v328
    %v331 = vmul.u32.u64.compose %v327, %v322
    %v332 = vextract.low.u32 %v331
    %v333 = vextract.high.u32 %v331
    %v334 = vmul.u32 %v327, %v318
    %v335 = vadd.s32 %v330, %v332
    %vm336 = vc.u32 %v330, %v332
    %v337 = vadd.s32 %v333, 1
    %v338 = vsel %vm336, %v337, %v333
    %v339 = vadd.s32 %v334, %v338
    %v340 = vadd.s32 %v339, 536870912
    %v341 = vshrl.u32 %v340, 30
    %v342 = vshll.u32 %v341, 30
    %v343 = vsub.s32 %v339, %v342
    %vm344 = vcmp.lt.s32.totalorder %v343, 0
    %v345 = vsub.s32 0, %v343
    %v346 = vsel %vm344, %v345, %v343
    %v347 = vclz %v346
    %v348 = vsub.s32 %v347, 2
    %vm349 = vcmp.gt.s32.totalorder 0, %v348
    %v350 = vsel %vm349, 0, %v348
    %v351 = vsub.s32 32, %v350
    %v352 = vshll.u32 %v343, %v350
    %v353 = vshrl.u32 %v335, %v351
    %v354 = vor.u32 %v352, %v353
    %v355 = vsub.s32 4294967266, %v350
    %v356 = vadd.s32 %v355, 127
    %v357 = vshll.u32 %v356, 23
    %v358 = vor.u32 4788187, %v357
    %v359 = vand.u32 2147483647, %v358
    %v361 = vcvt.s32.f32 %v354
    %v362 = vmul.f32 %v361, %v359
    %v363 = vxor.u32 %v362, 2147483648
    %v364 = vsel %vm281, %v363, %v362
    %v365 = vsub.s32 4, %v341
    %v366 = vsel %vm281, %v365, %v341
    %v367 = vsel %vm280, %v175, %v364
    %v368 = vsel %vm280, 0, %v366
    %v369 = vcosq.f32.pop %v367
    %v370 = vsinq.f32.pop %v367
    %vm371 = vweird.f32 %v175
    %v372 = vand.u32 %v368, 3
    %vm373 = vcmp.lt.s32.totalorder %v372, 2
    %vm374 = vcmp.eq.s32.totalorder %v372, 0
    %v375 = vxor.u32 %v370, 2147483648
    %v376 = vsel %vm374, %v369, %v375
    %vm377 = vcmp.eq.s32.totalorder %v372, 2
    %v378 = vxor.u32 %v369, 2147483648
    %v379 = vsel %vm377, %v378, %v370
    %v380 = vsel %vm373, %v376, %v379
    %v381 = vsel %vm371, nan, %v380
    %v382 = vmul.f32 %v172, %v278
    %v383 = vmul.f32 %v173, %v381
    %v384 = vand.u32 2147483647, %v174
    %vm385 = vcmp.le.f32.partialorder %v384, 0.7853982
    %vm386 = vcmp.lt.s32.totalorder %v174, 0
    %v387 = vand.u32 %v174, 2139095040
    %v388 = vshrl.u32 %v387, 23
    %v389 = vsub.s32 %v388, 127
    %v390 = vand.u32 2147483647, %v174
    %v391 = vand.u32 %v390, 8388607
    %v392 = vor.u32 %v391, 8388608
    %v393 = vsub.s32 0, %v392
    %v394 = vadd.s32 %v389, 1
    %vm395 = vcmp.gt.s32.totalorder %v394, 0
    %v396 = vsel %vm395, %v394, 0
    %v397 = vshrl.u32 %v396, 5
    %v398 = vand.u32 %v396, 31
    %v399 = vsub.s32 32, %v398
    %v400 = vshrl.u32 683565275, %v399
    %v401 = vshll.u32 683565275, %v398
    %v402 = vshrl.u32 2475754826, %v399
    %v403 = vor.u32 %v401, %v402
    %v404 = vshll.u32 2475754826, %v398
    %v405 = vshrl.u32 2131351028, %v399
    %v406 = vor.u32 %v404, %v405
    %v407 = vshll.u32 2131351028, %v398
    %v408 = vshrl.u32 2102212464, %v399
    %v409 = vor.u32 %v407, %v408
    %v410 = vshll.u32 2102212464, %v398
    %v411 = vshrl.u32 920167782, %v399
    %v412 = vor.u32 %v410, %v411
    %v413 = vshll.u32 920167782, %v398
    %v414 = vshrl.u32 1326507024, %v399
    %v415 = vor.u32 %v413, %v414
    %vm416 = vcmp.lt.s32.totalorder %v397, 1
    %vm417 = vcmp.lt.s32.totalorder %v397, 2
    %vm418 = vcmp.lt.s32.totalorder %v397, 3
    %vm419 = vcmp.lt.s32.totalorder %v397, 4
    %v420 = vsel %vm416, %v400, %v403
    %v421 = vsel %vm419, %v409, 2102212464
    %v422 = vsel %vm418, %v406, %v421
    %v423 = vsel %vm417, %v420, %v422
    %v424 = vsel %vm416, %v403, %v406
    %v425 = vsel %vm419, %v412, 920167782
    %v426 = vsel %vm418, %v409, %v425
    %v427 = vsel %vm417, %v424, %v426
    %v428 = vsel %vm416, %v406, %v409
    %v429 = vsel %vm419, %v415, 1326507024
    %v430 = vsel %vm418, %v412, %v429
    %v431 = vsel %vm417, %v428, %v430
    %v432 = vshll.u32 %v392, 8
    %v433 = vmul.u32.u64.compose %v432, %v431
    %v434 = vextract.low.u32 %v433
    %v435 = vextract.high.u32 %v433
    %v436 = vmul.u32.u64.compose %v432, %v427
    %v437 = vextract.low.u32 %v436
    %v438 = vextract.high.u32 %v436
    %v439 = vmul.u32 %v432, %v423
    %v440 = vadd.s32 %v435, %v437
    %vm441 = vc.u32 %v435, %v437
    %v442 = vadd.s32 %v438, 1
    %v443 = vsel %vm441, %v442, %v438
    %v444 = vadd.s32 %v439, %v443
    %v445 = vadd.s32 %v444, 536870912
    %v446 = vshrl.u32 %v445, 30
    %v447 = vshll.u32 %v446, 30
    %v448 = vsub.s32 %v444, %v447
    %vm449 = vcmp.lt.s32.totalorder %v448, 0
    %v450 = vsub.s32 0, %v448
    %v451 = vsel %vm449, %v450, %v448
    %v452 = vclz %v451
    %v453 = vsub.s32 %v452, 2
    %vm454 = vcmp.gt.s32.totalorder 0, %v453
    %v455 = vsel %vm454, 0, %v453
    %v456 = vsub.s32 32, %v455
    %v457 = vshll.u32 %v448, %v455
    %v458 = vshrl.u32 %v440, %v456
    %v459 = vor.u32 %v457, %v458
    %v460 = vsub.s32 4294967266, %v455
    %v461 = vadd.s32 %v460, 127
    %v462 = vshll.u32 %v461, 23
    %v463 = vor.u32 4788187, %v462
    %v464 = vand.u32 2147483647, %v463
    %v466 = vcvt.s32.f32 %v459
    %v467 = vmul.f32 %v466, %v464
    %v468 = vxor.u32 %v467, 2147483648
    %v469 = vsel %vm386, %v468, %v467
    %v470 = vsub.s32 4, %v446
    %v471 = vsel %vm386, %v470, %v446
    %v472 = vsel %vm385, %v174, %v469
    %v473 = vsel %vm385, 0, %v471
    %v474 = vcosq.f32.pop %v472
    %v475 = vsinq.f32.pop %v472
    %vm476 = vweird.f32 %v174
    %v477 = vadd.s32 %v473, 3
    %v478 = vand.u32 %v477, 3
    %vm479 = vcmp.lt.s32.totalorder %v478, 2
    %vm480 = vcmp.eq.s32.totalorder %v478, 0
    %v481 = vxor.u32 %v475, 2147483648
    %v482 = vsel %vm480, %v474, %v481
    %vm483 = vcmp.eq.s32.totalorder %v478, 2
    %v484 = vxor.u32 %v474, 2147483648
    %v485 = vsel %vm483, %v484, %v475
    %v486 = vsel %vm479, %v482, %v485
    %v487 = vsel %vm476, nan, %v486
    %v488 = vand.u32 2147483647, %v175
    %vm489 = vcmp.le.f32.partialorder %v488, 0.7853982
    %vm490 = vcmp.lt.s32.totalorder %v175, 0
    %v491 = vand.u32 %v175, 2139095040
    %v492 = vshrl.u32 %v491, 23
    %v493 = vsub.s32 %v492, 127
    %v494 = vand.u32 2147483647, %v175
    %v495 = vand.u32 %v494, 8388607
    %v496 = vor.u32 %v495, 8388608
    %v497 = vsub.s32 0, %v496
    %v498 = vadd.s32 %v493, 1
    %vm499 = vcmp.gt.s32.totalorder %v498, 0
    %v500 = vsel %vm499, %v498, 0
    %v501 = vshrl.u32 %v500, 5
    %v502 = vand.u32 %v500, 31
    %v503 = vsub.s32 32, %v502
    %v504 = vshrl.u32 683565275, %v503
    %v505 = vshll.u32 683565275, %v502
    %v506 = vshrl.u32 2475754826, %v503
    %v507 = vor.u32 %v505, %v506
    %v508 = vshll.u32 2475754826, %v502
    %v509 = vshrl.u32 2131351028, %v503
    %v510 = vor.u32 %v508, %v509
    %v511 = vshll.u32 2131351028, %v502
    %v512 = vshrl.u32 2102212464, %v503
    %v513 = vor.u32 %v511, %v512
    %v514 = vshll.u32 2102212464, %v502
    %v515 = vshrl.u32 920167782, %v503
    %v516 = vor.u32 %v514, %v515
    %v517 = vshll.u32 920167782, %v502
    %v518 = vshrl.u32 1326507024, %v503
    %v519 = vor.u32 %v517, %v518
    %vm520 = vcmp.lt.s32.totalorder %v501, 1
    %vm521 = vcmp.lt.s32.totalorder %v501, 2
    %vm522 = vcmp.lt.s32.totalorder %v501, 3
    %vm523 = vcmp.lt.s32.totalorder %v501, 4
    %v524 = vsel %vm520, %v504, %v507
    %v525 = vsel %vm523, %v513, 2102212464
    %v526 = vsel %vm522, %v510, %v525
    %v527 = vsel %vm521, %v524, %v526
    %v528 = vsel %vm520, %v507, %v510
    %v529 = vsel %vm523, %v516, 920167782
    %v530 = vsel %vm522, %v513, %v529
    %v531 = vsel %vm521, %v528, %v530
    %v532 = vsel %vm520, %v510, %v513
    %v533 = vsel %vm523, %v519, 1326507024
    %v534 = vsel %vm522, %v516, %v533
    %v535 = vsel %vm521, %v532, %v534
    %v536 = vshll.u32 %v496, 8
    %v537 = vmul.u32.u64.compose %v536, %v535
    %v538 = vextract.low.u32 %v537
    %v539 = vextract.high.u32 %v537
    %v540 = vmul.u32.u64.compose %v536, %v531
    %v541 = vextract.low.u32 %v540
    %v542 = vextract.high.u32 %v540
    %v543 = vmul.u32 %v536, %v527
    %v544 = vadd.s32 %v539, %v541
    %vm545 = vc.u32 %v539, %v541
    %v546 = vadd.s32 %v542, 1
    %v547 = vsel %vm545, %v546, %v542
    %v548 = vadd.s32 %v543, %v547
    %v549 = vadd.s32 %v548, 536870912
    %v550 = vshrl.u32 %v549, 30
    %v551 = vshll.u32 %v550, 30
    %v552 = vsub.s32 %v548, %v551
    %vm553 = vcmp.lt.s32.totalorder %v552, 0
    %v554 = vsub.s32 0, %v552
    %v555 = vsel %vm553, %v554, %v552
    %v556 = vclz %v555
    %v557 = vsub.s32 %v556, 2
    %vm558 = vcmp.gt.s32.totalorder 0, %v557
    %v559 = vsel %vm558, 0, %v557
    %v560 = vsub.s32 32, %v559
    %v561 = vshll.u32 %v552, %v559
    %v562 = vshrl.u32 %v544, %v560
    %v563 = vor.u32 %v561, %v562
    %v564 = vsub.s32 4294967266, %v559
    %v565 = vadd.s32 %v564, 127
    %v566 = vshll.u32 %v565, 23
    %v567 = vor.u32 4788187, %v566
    %v568 = vand.u32 2147483647, %v567
    %v570 = vcvt.s32.f32 %v563
    %v571 = vmul.f32 %v570, %v568
    %v572 = vxor.u32 %v571, 2147483648
    %v573 = vsel %vm490, %v572, %v571
    %v574 = vsub.s32 4, %v550
    %v575 = vsel %vm490, %v574, %v550
    %v576 = vsel %vm489, %v175, %v573
    %v577 = vsel %vm489, 0, %v575
    %v578 = vcosq.f32.pop %v576
    %v579 = vsinq.f32.pop %v576
    %vm580 = vweird.f32 %v175
    %v581 = vadd.s32 %v577, 3
    %v582 = vand.u32 %v581, 3
    %vm583 = vcmp.lt.s32.totalorder %v582, 2
    %vm584 = vcmp.eq.s32.totalorder %v582, 0
    %v585 = vxor.u32 %v579, 2147483648
    %v586 = vsel %vm584, %v578, %v585
    %vm587 = vcmp.eq.s32.totalorder %v582, 2
    %v588 = vxor.u32 %v578, 2147483648
    %v589 = vsel %vm587, %v588, %v579
    %v590 = vsel %vm583, %v586, %v589
    %v591 = vsel %vm580, nan, %v590
    %v592 = vmul.f32 %v172, %v487
    %v593 = vmul.f32 %v173, %v591
    %v594 = vld [vmem:[#allocation4] sm:$0xff]
    %v595 = vld [vmem:[#allocation4 + $0x8] sm:$0xff]
    %v600 = vcombine.low %v382, %v383
    %v601 = vcombine.low %v592, %v593
    %v604 = vadd.f32 %v594, %v600
    %v605 = vadd.f32 %v595, %v601
    %606 = vst [vmem:[#allocation7] sm:$0xff] %v604
    %607 = vst [vmem:[#allocation7 + $0x8] sm:$0xff] %v605
    // Predicated region
    $region10: #{tpu_custom_call.1} parent=1 // pred_check
      _
    $region11: #{tpu_custom_call.1} parent=1 // pred_check_branch
      %609 = sbr.rel (0) target = $region13
    $region12: #{tpu_custom_call.1} parent=1 // pred_region
      %s611 = ssub.s32 256, 256
      %612 = vsyncadd [#allocation6], %s611
      %s614 = sshll.u32 [#allocation7], 4
      %s615 = int_to_ptr.vmem [resolvable:$true] %s614
      %617 = dma.vmem_to_hbm [thread:$0]  %s615, 256, %s2, [#allocation6]
    $region13: #{tpu_custom_call.1} parent=1 // pred_fallthru
      _
    // Predicated region
    $region14: #{tpu_custom_call.1} parent=1 // pred_check
      _
    $region15: #{tpu_custom_call.1} parent=1 // pred_check_branch
      %619 = sbr.rel (0) target = $region17
    $region16: #{tpu_custom_call.1} parent=1 // pred_region
      %620 = dma.done [#allocation6], 256
    $region17: #{tpu_custom_call.1} parent=1 // pred_fallthru
      _
    %621 = vsyncpa [#allocation5], 1
    %622 = vsyncpa [#allocation6], 1

</llo_original>
